<compile_context>
chip_gen: v7x
topology: tpu7x:2x2x1
jax: 0.10.0
libtpu: 0.0.40
codegen_flags: <defaults>
</compile_context>

<pallas_src>
import functools

import jax
import jax.numpy as jnp
from jax import lax
from jax.experimental import pallas as pl
from jax.experimental.pallas import tpu as pltpu

_MIB = 1024 * 1024


# ----------------------------- kernels --------------------------------------

def _fc_kernel_resident(x_ref, w_ref, b_ref, o_ref, *, activation, precision):
    """Whole weight resident in VMEM (constant index_map => fetched once).

    x: (tm, K); w: (N, K) native PyTorch layout (contracted on last dims, so
    no transpose anywhere); b: (1, N); o: (tm, N).
    """
    out = lax.dot_general(
        x_ref[...], w_ref[...],
        dimension_numbers=(((1,), (1,)), ((), ())),
        preferred_element_type=jnp.float32,
        precision=precision,
    )
    out = out + b_ref[...].astype(jnp.float32)
    if activation:
        out = jnp.maximum(out, 0.0)
    o_ref[...] = out.astype(o_ref.dtype)


def _fc_kernel_tiled(x_ref, w_ref, b_ref, o_ref, acc_ref, *, activation,
                     precision):
    """(tm, tn) output tile accumulated over the K grid axis (last,
    "arbitrary").  w tile is (tn, tk) in native layout -> contract last dims.
    """
    k = pl.program_id(2)

    @pl.when(k == 0)
    def _():
        acc_ref[...] = jnp.zeros_like(acc_ref)

    acc_ref[...] += lax.dot_general(
        x_ref[...], w_ref[...],
        dimension_numbers=(((1,), (1,)), ((), ())),
        preferred_element_type=jnp.float32,
        precision=precision,
    )

    @pl.when(k == pl.num_programs(2) - 1)
    def _():
        out = acc_ref[...] + b_ref[...].astype(jnp.float32)   # (1, tn) broadcast
        if activation:
            out = jnp.maximum(out, 0.0)
        o_ref[...] = out.astype(o_ref.dtype)


# ----------------------------- helpers ---------------------------------------

def _round_up(x, m):
    return (x + m - 1) // m * m


def _pick_m_tile(rows):
    """Big, 16-aligned M tiles; guarantee >=2 M blocks for moderate R so the
    'parallel' M axis can shard across v7x's two TensorCores."""
    for t in (512, 256, 128):
        if rows >= 2 * t:
            return t
    if rows > 128:
        return 128
    return rows                      # tiny: single full-extent block (legal)


def _pick_n_tile(cols):
    for t in (512, 256, 128):
        if cols >= t:
            return t
    return cols                      # small head (e.g. CRF): full-extent block


def _vmem_planning_budget():
    """Physical VMEM minus headroom for compiler-internal scratch/semaphores.
    v5e/v6e: 128 MiB -> ~112 MiB usable; v7x: 64 MiB -> ~48 MiB usable."""
    try:
        phys = int(getattr(pltpu.get_tpu_info(), "vmem_capacity_bytes",
                           64 * _MIB))
    except Exception:
        phys = 64 * _MIB
    return max(phys - 16 * _MIB, 32 * _MIB)


# ----------------------------- forward ---------------------------------------

def fc_layer_forward(inputs, weight, bias, *, activation=False, precision=None):
    """Pallas TPU forward for `Fc_Layer`.

    inputs: (seq_len, batch, d_in); weight: (d_out, d_in) (nn.Linear layout);
    bias: (d_out,).  Returns (batch, seq_len, d_out) — the original module
    reshapes the flat (seq*batch, d_out) result with .view(batch, seq_len, -1)
    and that quirk is preserved.

    `precision=jax.lax.Precision.HIGHEST` can be passed for bit-closer f32
    GEMM parity with PyTorch at ~3-6x MXU cost (default keeps MXU-native).
    """
    seq_len, batch_size, d_in = inputs.shape
    d_out, d_in_w = weight.shape
    assert d_in_w == d_in
    R = seq_len * batch_size

    dtype = inputs.dtype
    itemsize = jnp.dtype(dtype).itemsize

    x2d = inputs.reshape(R, d_in)            # (R, K)
    b2d = bias.reshape(1, d_out)             # (1, N)

    vmem_budget = _vmem_planning_budget()
    tm = _pick_m_tile(R)

    cost = pl.CostEstimate(
        flops=2 * R * d_in * d_out,
        bytes_accessed=(R * d_in + d_out * d_in + d_out + R * d_out) * itemsize,
        transcendentals=0,
    )

    w_bytes = d_out * d_in * itemsize
    resident_ok = (w_bytes <= 8 * _MIB) and (d_out <= 2048) and (d_in <= 8192)

    if resident_ok:
        # Path A footprint (double-buffered blocks), shrink tm until it fits.
        def _needed(t):
            return 2 * (t * d_in + d_out * d_in + d_out + t * d_out) * itemsize
        needed = _needed(tm)
        while needed > vmem_budget and tm > 128:
            tm = max(128, tm // 2)
            needed = _needed(tm)
        if needed > vmem_budget:
            resident_ok = False

    if resident_ok:
        # ---- Path A: weight + bias VMEM-resident (constant index_map =>
        # fetched from HBM exactly once); 1-D grid over M, boundary block may
        # be partial (stores masked).
        out2d = pl.pallas_call(
            functools.partial(_fc_kernel_resident, activation=activation,
                              precision=precision),
            out_shape=jax.ShapeDtypeStruct((R, d_out), dtype),
            grid_spec=pltpu.PrefetchScalarGridSpec(
                num_scalar_prefetch=0,
                grid=(pl.cdiv(R, tm),),
                in_specs=[
                    pl.BlockSpec((tm, d_in), lambda i: (i, 0)),       # x strip
                    pl.BlockSpec((d_out, d_in), lambda i: (0, 0)),    # W resident
                    pl.BlockSpec((1, d_out), lambda i: (0, 0)),       # b resident
                ],
                out_specs=pl.BlockSpec((tm, d_out), lambda i: (i, 0)),
            ),
            compiler_params=pltpu.CompilerParams(
                dimension_semantics=("parallel",),
                vmem_limit_bytes=vmem_budget,
            ),
            cost_estimate=cost,
        )(x2d, weight, b2d)
    else:
        # ---- Path B: large weight -> (M, N, K) tiling with an f32 VMEM
        # accumulator held across the K axis (last, "arbitrary").
        tn = _pick_n_tile(d_out)
        if d_in <= 1024:
            k_pad, tk = d_in, d_in                # single K step, no padding
            w_k = weight
        else:
            k_pad = _round_up(d_in, 128)
            tk = 512 if k_pad % 512 == 0 else (256 if k_pad % 256 == 0 else 128)
            if k_pad != d_in:
                # One-time zero pad of the contraction dim (exact for matmul);
                # only hit for large, non-128-aligned d_in.
                x2d = jnp.pad(x2d, ((0, 0), (0, k_pad - d_in)))
                w_k = jnp.pad(weight, ((0, 0), (0, k_pad - d_in)))
            else:
                w_k = weight

        out2d = pl.pallas_call(
            functools.partial(_fc_kernel_tiled, activation=activation,
                              precision=precision),
            out_shape=jax.ShapeDtypeStruct((R, d_out), dtype),
            grid_spec=pltpu.PrefetchScalarGridSpec(
                num_scalar_prefetch=0,
                grid=(pl.cdiv(R, tm), pl.cdiv(d_out, tn), k_pad // tk),
                in_specs=[
                    pl.BlockSpec((tm, tk), lambda i, j, k: (i, k)),   # x tile
                    pl.BlockSpec((tn, tk), lambda i, j, k: (j, k)),   # W native
                    pl.BlockSpec((1, tn), lambda i, j, k: (0, j)),    # bias tile
                ],
                out_specs=pl.BlockSpec((tm, tn), lambda i, j, k: (i, j)),
                scratch_shapes=[pltpu.VMEM((tm, tn), jnp.float32)],
            ),
            compiler_params=pltpu.CompilerParams(
                dimension_semantics=("parallel", "parallel", "arbitrary"),
                vmem_limit_bytes=vmem_budget,
            ),
            cost_estimate=cost,
        )(x2d, w_k, b2d)

    # Replicate PyTorch: flat (seq*batch, d_out) -> view(batch, seq_len, d_out)
    return out2d.reshape(batch_size, seq_len, d_out)


if __name__ == "__main__":
    key = jax.random.PRNGKey(0)
    k1, k2, k3 = jax.random.split(key, 3)

    # Small shapes consistent with the module: seq=8, batch=2, d_in=32, d_out=16
    seq_len, batch_size, d_in, d_out = 8, 2, 32, 16
    activation = True

    inputs = jax.random.normal(k1, (seq_len, batch_size, d_in), dtype=jnp.float32)
    weight = jax.random.normal(k2, (d_out, d_in), dtype=jnp.float32) * 0.1
    bias = jax.random.normal(k3, (d_out,), dtype=jnp.float32) * 0.1

    out = fc_layer_forward(inputs, weight, bias, activation=activation)
    out = jax.block_until_ready(out)

    # Pure-JAX reference of the PyTorch forward.
    x2d = inputs.reshape(seq_len * batch_size, d_in)
    ref2d = x2d @ weight.T + bias
    if activation:
        ref2d = jnp.maximum(ref2d, 0.0)
    ref = ref2d.reshape(batch_size, seq_len, d_out)

    assert out.shape == (batch_size, seq_len, d_out)
    assert jnp.allclose(out, ref, atol=1e-5, rtol=1e-4)

    print("KERNEL_OK")
</pallas_src>

<mosaic_0001>
module attributes {stable_mosaic.version = 11 : i64} {
  func.func @_fc_kernel_resident(%arg0: i32, %arg1: memref<16x32xf32, #tpu.memory_space<vmem>>, %arg2: memref<16x32xf32, #tpu.memory_space<vmem>>, %arg3: memref<1x16xf32, #tpu.memory_space<vmem>>, %arg4: memref<16x16xf32, #tpu.memory_space<vmem>>) attributes {dimension_semantics = [#tpu.dimension_semantics<parallel>], iteration_bounds = array<i64: 1>, scalar_prefetch = 0 : i64, scratch_operands = 0 : i64, tpu.core_type = #tpu.core_type<tc>, window_params = [{transform_indices = @transform_0, window_bounds = array<i64: 16, 32>}, {pipeline_mode = #tpu.pipeline_mode<synchronous>, transform_indices = @transform_1, window_bounds = array<i64: 16, 32>}, {pipeline_mode = #tpu.pipeline_mode<synchronous>, transform_indices = @transform_2, window_bounds = array<i64: 1, 16>}, {transform_indices = @transform_3, window_bounds = array<i64: 16, 16>}]} {
    %c0 = arith.constant 0 : index
    %c0_0 = arith.constant 0 : index
    %0 = vector.load %arg1[%c0, %c0_0] : memref<16x32xf32, #tpu.memory_space<vmem>>, vector<16x32xf32>
    %c0_1 = arith.constant 0 : index
    %c0_2 = arith.constant 0 : index
    %1 = vector.load %arg2[%c0_1, %c0_2] : memref<16x32xf32, #tpu.memory_space<vmem>>, vector<16x32xf32>
    %cst = arith.constant dense<0.000000e+00> : vector<16x16xf32>
    %2 = tpu.matmul %0, %1, %cst {dimension_numbers = #tpu.dot_dimension_numbers<[1], [1], [0], [0], [0, 0, 1, 0], [], []>} : vector<16x32xf32>, vector<16x32xf32>, vector<16x16xf32> -> vector<16x16xf32>
    %c0_3 = arith.constant 0 : index
    %c0_4 = arith.constant 0 : index
    %3 = vector.load %arg3[%c0_3, %c0_4] : memref<1x16xf32, #tpu.memory_space<vmem>>, vector<1x16xf32>
    %4 = vector.broadcast %3 : vector<1x16xf32> to vector<16x16xf32>
    %5 = arith.addf %2, %4 : vector<16x16xf32>
    %cst_5 = arith.constant 0.000000e+00 : f32
    %6 = vector.broadcast %cst_5 : f32 to vector<16x16xf32>
    %7 = arith.maximumf %5, %6 : vector<16x16xf32>
    %c0_6 = arith.constant 0 : index
    %c0_7 = arith.constant 0 : index
    %8 = vector.load %arg4[%c0_6, %c0_7] : memref<16x16xf32, #tpu.memory_space<vmem>>, vector<16x16xf32>
    tpu.vector_store %arg4[%c0_6, %c0_7], %7 {strides = array<i32>} : memref<16x16xf32, #tpu.memory_space<vmem>>, vector<16x16xf32>,
    return
  }
  func.func @transform_0(%arg0: i32) -> (i32, i32) {
    %c0_i32 = arith.constant 0 : i32
    %c0_i32_0 = arith.constant 0 : i32
    return %arg0, %c0_i32 : i32, i32
  }
  func.func @transform_1(%arg0: i32) -> (i32, i32) {
    %c0_i32 = arith.constant 0 : i32
    %c0_i32_0 = arith.constant 0 : i32
    %c0_i32_1 = arith.constant 0 : i32
    return %c0_i32, %c0_i32_0 : i32, i32
  }
  func.func @transform_2(%arg0: i32) -> (i32, i32) {
    %c0_i32 = arith.constant 0 : i32
    %c0_i32_0 = arith.constant 0 : i32
    %c0_i32_1 = arith.constant 0 : i32
    return %c0_i32, %c0_i32_0 : i32, i32
  }
  func.func @transform_3(%arg0: i32) -> (i32, i32) {
    %c0_i32 = arith.constant 0 : i32
    %c0_i32_0 = arith.constant 0 : i32
    return %arg0, %c0_i32 : i32, i32
  }
}

</mosaic_0001>

<llo_original>
// kernel: tpu_custom_call.1
$region0: #{tpu_custom_call.1}
  #allocation0 [shape = 'u32[]', space=smem, size = 0x4, offset = 0x4, fixed_abs, tag = 'smem constant byte address 0x4 - core index']
  #allocation1 [shape = 'u32[144,128]{1,0:T(1,128)}', space=vmem, size = 0x12000, scoped, tag = 'internal scratch']
  %s0 = inlined_call_operand.hbm [shape: f32[16,32], index: 0, kind: input, shape index: {}]
  %s1 = inlined_call_operand.hbm [shape: f32[16,32], index: 1, kind: input, shape index: {}]
  %s2 = inlined_call_operand.vmem [shape: f32[1,16], index: 2, kind: input, shape index: {}]
  %s3 = inlined_call_operand.hbm [shape: f32[16,16], index: 3, kind: output, shape index: {}]
  %s4 = sld [smem:[#allocation0]]
  $region30: #{tpu_custom_call.1} parent=0
    _
  %s6 = ssub.s32 1, %s4
  %s7 = scalar_select 0, %s6, %s4
  $region1: #{tpu_custom_call.1} parent=0
    #allocation2 [shape = 'u8[8192]{0}', space=vmem, size = 0x2000, scoped, tag = 'input window, operand 0, single buffered']
    #allocation3 [shape = 's32[1]{0}', space=sflag, size = 0x4, scoped, tag = 'scoped memory for tpu_custom_call.1']
    #allocation4 [shape = 's32[1]{0}', space=sflag, size = 0x4, scoped, tag = 'scoped memory for tpu_custom_call.1']
    #allocation5 [shape = 'u8[8192]{0}', space=vmem, size = 0x2000, scoped, tag = 'input window, operand 1, single buffered']
    #allocation6 [shape = 's32[1]{0}', space=sflag, size = 0x4, scoped, tag = 'scoped memory for tpu_custom_call.1']
    #allocation7 [shape = 'u8[8192]{0}', space=vmem, size = 0x2000, scoped, tag = 'output window, operand 0, single buffered']
    %8 = vsyncpa [#allocation3], 0
    %9 = vsyncpa [#allocation6], 0
    %10 = vsyncpa [#allocation4], 0
    // Predicated region
    $region2: #{tpu_custom_call.1} parent=1 // pred_check
      _
    $region3: #{tpu_custom_call.1} parent=1 // pred_check_branch
      %12 = sbr.rel (0) target = $region5
    $region4: #{tpu_custom_call.1} parent=1 // pred_region
      %s14 = ssub.s32 256, 256
      %15 = vsyncadd [#allocation3], %s14
      %s16 = sshll.u32 [#allocation2], 4
      %s17 = int_to_ptr.vmem [resolvable:$true] %s16
      %22 = dma.hbm_to_vmem [thread:$0]  %s0, 256, %s17, [#allocation3], 128, 128, 8
    $region5: #{tpu_custom_call.1} parent=1 // pred_fallthru
      _
    // Predicated region
    $region6: #{tpu_custom_call.1} parent=1 // pred_check
      _
    $region7: #{tpu_custom_call.1} parent=1 // pred_check_branch
      %24 = sbr.rel (0) target = $region9
    $region8: #{tpu_custom_call.1} parent=1 // pred_region
      %s26 = ssub.s32 256, 256
      %27 = vsyncadd [#allocation6], %s26
      %s28 = sshll.u32 [#allocation5], 4
      %s29 = int_to_ptr.vmem [resolvable:$true] %s28
      %34 = dma.hbm_to_vmem [thread:$0]  %s1, 256, %s29, [#allocation6], 128, 128, 8
    $region9: #{tpu_custom_call.1} parent=1 // pred_fallthru
      _
    // Predicated region
    $region10: #{tpu_custom_call.1} parent=1 // pred_check
      _
    $region11: #{tpu_custom_call.1} parent=1 // pred_check_branch
      %36 = sbr.rel (0) target = $region13
    $region12: #{tpu_custom_call.1} parent=1 // pred_region
      _
    $region13: #{tpu_custom_call.1} parent=1 // pred_fallthru
      _
    // Predicated region
    $region14: #{tpu_custom_call.1} parent=1 // pred_check
      _
    $region15: #{tpu_custom_call.1} parent=1 // pred_check_branch
      %38 = sbr.rel (0) target = $region17
    $region16: #{tpu_custom_call.1} parent=1 // pred_region
      %39 = dma.done [#allocation3], 256
    $region17: #{tpu_custom_call.1} parent=1 // pred_fallthru
      _
    // Predicated region
    $region18: #{tpu_custom_call.1} parent=1 // pred_check
      _
    $region19: #{tpu_custom_call.1} parent=1 // pred_check_branch
      %41 = sbr.rel (0) target = $region21
    $region20: #{tpu_custom_call.1} parent=1 // pred_region
      %42 = dma.done [#allocation6], 256
    $region21: #{tpu_custom_call.1} parent=1 // pred_fallthru
      _
    %v43 = vld [vmem:[#allocation2] sm:$0xff]
    %v44 = vld [vmem:[#allocation2 + $0x8] sm:$0xff]
    %v45 = vld [vmem:[#allocation5] sm:$0xff]
    %v46 = vld [vmem:[#allocation5 + $0x8] sm:$0xff]
    %v47 = vld [vmem:[%s2] sm:$0x1]
    %v49 = vlaneseq
    %v50 = vshrl.u32 %v49, 7
    %v51 = vsub.s32 0, %v50
    %v52 = vrot.slane %v47, %v51
    %vm54 = vcmask 261120
    %v56 = vsel %vm54, %v43, 0
    %v59 = vsel %vm54, %v44, 0
    %v62 = vsel %vm54, %v45, 0
    %v65 = vsel %vm54, %v46, 0
    %67 = vmatprep.subr.mxu0 0.0
    %68 = vmatpush1.xpose.msra.mxu0 %v62
    %69 = vmatprep.subr.mxu0 0.0
    %70 = vmatpush1.xpose.msra.mxu0 %v65
    %71 = vmatprep.subr.mxu0 0.0
    %72 = vmatpush1.xpose.msra.mxu0 0.0
    %73 = vmatprep.subr.mxu0 0.0
    %74 = vmatpush1.xpose.msra.mxu0 0.0
    %75 = vmatprep.subr.mxu0 0.0
    %76 = vmatpush1.xpose.msra.mxu0 0.0
    %77 = vmatprep.subr.mxu0 0.0
    %78 = vmatpush1.xpose.msra.mxu0 0.0
    %79 = vmatprep.subr.mxu0 0.0
    %80 = vmatpush1.xpose.msra.mxu0 0.0
    %81 = vmatprep.subr.mxu0 0.0
    %82 = vmatpush1.xpose.msra.mxu0 0.0
    %83 = vmatprep.subr.mxu0 0.0
    %84 = vmatpush1.xpose.msra.mxu0 0.0
    %85 = vmatprep.subr.mxu0 0.0
    %86 = vmatpush1.xpose.msra.mxu0 0.0
    %87 = vmatprep.subr.mxu0 0.0
    %88 = vmatpush1.xpose.msra.mxu0 0.0
    %89 = vmatprep.subr.mxu0 0.0
    %90 = vmatpush1.xpose.msra.mxu0 0.0
    %91 = vmatprep.subr.mxu0 0.0
    %92 = vmatpush1.xpose.msra.mxu0 0.0
    %93 = vmatprep.subr.mxu0 0.0
    %94 = vmatpush1.xpose.msra.mxu0 0.0
    %95 = vmatprep.subr.mxu0 0.0
    %96 = vmatpush1.xpose.msra.mxu0 0.0
    %97 = vmatprep.subr.mxu0 0.0
    %98 = vmatpush1.xpose.msra.mxu0 0.0
    %99 = vmatprep.subr.mxu0 0.0
    %100 = vmatpush1.xpose.msra.mxu0 0.0
    %101 = vmatprep.subr.mxu0 0.0
    %102 = vmatpush1.xpose.msra.mxu0 0.0
    %103 = vmatprep.subr.mxu0 0.0
    %104 = vmatpush1.xpose.msra.mxu0 0.0
    %105 = vmatprep.subr.mxu0 0.0
    %106 = vmatpush1.xpose.msra.mxu0 0.0
    %107 = vmatprep.subr.mxu0 0.0
    %108 = vmatpush1.xpose.msra.mxu0 0.0
    %109 = vmatprep.subr.mxu0 0.0
    %110 = vmatpush1.xpose.msra.mxu0 0.0
    %111 = vmatprep.subr.mxu0 0.0
    %112 = vmatpush1.xpose.msra.mxu0 0.0
    %113 = vmatprep.subr.mxu0 0.0
    %114 = vmatpush1.xpose.msra.mxu0 0.0
    %115 = vmatprep.subr.mxu0 0.0
    %116 = vmatpush1.xpose.msra.mxu0 0.0
    %117 = vmatprep.subr.mxu0 0.0
    %118 = vmatpush1.xpose.msra.mxu0 0.0
    %119 = vmatprep.subr.mxu0 0.0
    %120 = vmatpush1.xpose.msra.mxu0 0.0
    %121 = vmatprep.subr.mxu0 0.0
    %122 = vmatpush1.xpose.msra.mxu0 0.0
    %123 = vmatprep.subr.mxu0 0.0
    %124 = vmatpush1.xpose.msra.mxu0 0.0
    %125 = vmatprep.subr.mxu0 0.0
    %126 = vmatpush1.xpose.msra.mxu0 0.0
    %127 = vmatprep.subr.mxu0 0.0
    %128 = vmatpush1.xpose.msra.mxu0 0.0
    %129 = vmatprep.subr.mxu0 0.0
    %130 = vmatpush1.xpose.msra.mxu0 0.0
    %131 = vmatprep.mubr.f32.mxu0 0.0
    %132 = vmatmul.mubr.f32.gmra.mrb[0].mxu0 %v56
    %v133 = vpop.f32.mrb[0].mxu0
    %v134 = vadd.f32 %v52, %v133
    %v135 = vpop.f32.mrb[0].mxu0
    %136 = vmatprep.mubr.f32.mxu0 0.0
    %137 = vmatmul.mubr.f32.gmra.mrb[0].mxu0 %v59
    %v138 = vpop.f32.mrb[0].mxu0
    %v139 = vadd.f32 %v52, %v138
    %v140 = vpop.f32.mrb[0].mxu0
    %141 = vdwg.mxu0
    %v142 = vmax.f32 %v134, 0.0
    %v143 = vmax.f32 %v139, 0.0
    %vm144 = vcmask 130048
    %145 = vst.msk [vmem:[#allocation7] sm:$0xff] %vm144, %v142
    %146 = vst.msk [vmem:[#allocation7 + $0x8] sm:$0xff] %vm144, %v143
    // Predicated region
    $region22: #{tpu_custom_call.1} parent=1 // pred_check
      _
    $region23: #{tpu_custom_call.1} parent=1 // pred_check_branch
      %148 = sbr.rel (0) target = $region25
    $region24: #{tpu_custom_call.1} parent=1 // pred_region
      %s150 = ssub.s32 256, 256
      %151 = vsyncadd [#allocation4], %s150
      %s152 = sshll.u32 [#allocation7], 4
      %s153 = int_to_ptr.vmem [resolvable:$true] %s152
      %158 = dma.vmem_to_hbm [thread:$0]  %s153, 256, %s3, [#allocation4], 128, 128, 8
    $region25: #{tpu_custom_call.1} parent=1 // pred_fallthru
      _
    // Predicated region
    $region26: #{tpu_custom_call.1} parent=1 // pred_check
      _
    $region27: #{tpu_custom_call.1} parent=1 // pred_check_branch
      %160 = sbr.rel (0) target = $region29
    $region28: #{tpu_custom_call.1} parent=1 // pred_region
      %161 = dma.done [#allocation4], 256
    $region29: #{tpu_custom_call.1} parent=1 // pred_fallthru
      _
    %162 = vsyncpa [#allocation3], 1
    %163 = vsyncpa [#allocation6], 1
    %164 = vsyncpa [#allocation4], 1

</llo_original>
